<compile_context>
chip_gen: v7x
topology: tpu7x:2x2x1
jax: 0.10.0
libtpu: 0.0.40
codegen_flags: <defaults>
</compile_context>

<pallas_src>
import jax
import jax.numpy as jnp
from jax.experimental import pallas as pl
from jax.experimental.pallas import tpu as pltpu


def _es_kernel(oma_ref, loga_ref, x_ref, v0_ref, o_ref):
    # oma_ref : SMEM (h,)      f32  1 - alpha_h           (scalar prefetch)
    # loga_ref: SMEM (h,)      f32  log(alpha_h), clamped (scalar prefetch)
    # x_ref   : VMEM (1, t, h*d)  values for batch bi (lane-dense, heads folded in lanes)
    # v0_ref  : VMEM (1, h*d)     initial state (lane-dense, shared across batches)
    # o_ref   : VMEM (1, t, h*d)
    t = x_ref.shape[1]
    hd = x_ref.shape[2]
    h = oma_ref.shape[0]
    d = hd // h

    x = x_ref[0]  # (t, h*d) f32

    # Index grids shared by all heads (built once, VPU).
    ji = jax.lax.broadcasted_iota(jnp.int32, (t, t), 0)
    ii = jax.lax.broadcasted_iota(jnp.int32, (t, t), 1)
    causal = ji >= ii
    expo = jnp.maximum(ji - ii, 0).astype(jnp.float32)                         # (t, t), >= 0
    jcol = jax.lax.broadcasted_iota(jnp.int32, (t, 1), 0).astype(jnp.float32)  # (t, 1)

    # Static unroll over heads: W_h generated on the fly (EUP exp), matmul on the MXU.
    head_outs = []
    for hh in range(h):
        oma = oma_ref[hh]    # 1 - alpha_h
        loga = loga_ref[hh]  # log(alpha_h), clamped in wrapper -> exp arg is always <= 0

        # W[j,i] = (1-alpha) * alpha^(j-i) for i <= j, else 0.
        w = jnp.where(causal, oma * jnp.exp(expo * loga), 0.0)                 # (t, t)
        init_w = jnp.exp((jcol + 1.0) * loga)                                  # alpha^(j+1), (t, 1)

        xh = x[:, hh * d:(hh + 1) * d]                                         # (t, d) static lane slice
        v0h = v0_ref[0, hh * d:(hh + 1) * d]                                   # (d,)
        out_h = jnp.dot(w, xh, preferred_element_type=jnp.float32)             # causal smoothing sum
        out_h = out_h + init_w * v0h                                           # + alpha^(j+1) * v0_h
        head_outs.append(out_h)

    # Single full-width lane-dense store per grid step.
    out_full = head_outs[0] if h == 1 else jnp.concatenate(head_outs, axis=-1)  # (t, h*d)
    o_ref[0] = out_full.astype(o_ref.dtype)


def exponential_smoothing(values, smoothing_weight, v0_param):
    """values: (b, t, h, d) float32 (PyTorch layout). Returns (b, t, h, d)."""
    b, t, h, d = values.shape

    # ---- tiny per-head scalar setup (h floats; not a per-element pass) ----
    alpha = jax.nn.sigmoid(smoothing_weight.astype(jnp.float32))[:, 0]   # (h,)
    one_minus_alpha = (1.0 - alpha).astype(jnp.float32)                  # (h,)
    # Clamp before log so alpha -> 0 never produces NaN / inf in exp().
    log_alpha = jnp.log(jnp.maximum(alpha, jnp.float32(1e-30))).astype(jnp.float32)

    # Free reshapes (contiguous trailing-dim merges): lane-dense blocks, no transpose.
    x2 = values.astype(jnp.float32).reshape(b, t, h * d)
    v0 = v0_param.astype(jnp.float32).reshape(1, h * d)

    out2 = pl.pallas_call(
        _es_kernel,
        out_shape=jax.ShapeDtypeStruct((b, t, h * d), jnp.float32),
        grid_spec=pltpu.PrefetchScalarGridSpec(
            num_scalar_prefetch=2,
            grid=(b,),
            in_specs=[
                pl.BlockSpec((1, t, h * d), lambda bi, oma, loga: (bi, 0, 0)),  # x (per batch)
                pl.BlockSpec((1, h * d), lambda bi, oma, loga: (0, 0)),         # v0 (resident)
            ],
            out_specs=pl.BlockSpec((1, t, h * d), lambda bi, oma, loga: (bi, 0, 0)),
        ),
        compiler_params=pltpu.CompilerParams(
            dimension_semantics=("parallel",)),
    )(one_minus_alpha, log_alpha, x2, v0)

    # Free reshape back to the PyTorch layout.
    return out2.reshape(b, t, h, d)


def _reference(values, smoothing_weight, v0_param):
    """Pure-JAX recurrence reference: s_j = alpha*s_{j-1} + (1-alpha)*x_j, s_{-1}=v0."""
    b, t, h, d = values.shape
    alpha = jax.nn.sigmoid(smoothing_weight)             # (h, 1)
    alpha_b = alpha[None, :, :]                          # (1, h, 1)
    s0 = jnp.broadcast_to(v0_param[0, 0], (b, h, d))     # (b, h, d)
    xs = jnp.transpose(values, (1, 0, 2, 3))             # (t, b, h, d)

    def step(s, x_t):
        s_new = alpha_b * s + (1.0 - alpha_b) * x_t
        return s_new, s_new

    _, ys = jax.lax.scan(step, s0, xs)                   # (t, b, h, d)
    return jnp.transpose(ys, (1, 0, 2, 3))


if __name__ == "__main__":
    key = jax.random.PRNGKey(0)
    b, t, h, d = 2, 8, 4, 32
    k1, k2, k3 = jax.random.split(key, 3)

    # deterministic "parameters" (module __init__: randn(nhead,1), randn(1,1,nhead,dim))
    smoothing_weight = jax.random.normal(k1, (h, 1), jnp.float32)
    v0_param = jax.random.normal(k2, (1, 1, h, d), jnp.float32)
    values = jax.random.normal(k3, (b, t, h, d), jnp.float32)

    out = exponential_smoothing(values, smoothing_weight, v0_param)
    out = jax.block_until_ready(out)

    ref = jax.block_until_ready(_reference(values, smoothing_weight, v0_param))
    assert out.shape == (b, t, h, d)
    assert jnp.allclose(out, ref, atol=1e-4, rtol=1e-4), "mismatch vs reference"

    print("KERNEL_OK")
</pallas_src>

<mosaic_0001>
module attributes {stable_mosaic.version = 11 : i64} {
  func.func @_es_kernel(%arg0: i32, %arg1: memref<4xf32, #tpu.memory_space<smem>>, %arg2: memref<4xf32, #tpu.memory_space<smem>>, %arg3: memref<1x8x128xf32, #tpu.memory_space<vmem>>, %arg4: memref<1x128xf32, #tpu.memory_space<vmem>>, %arg5: memref<1x8x128xf32, #tpu.memory_space<vmem>>) attributes {dimension_semantics = [#tpu.dimension_semantics<parallel>], iteration_bounds = array<i64: 2>, scalar_prefetch = 2 : i64, scratch_operands = 0 : i64, tpu.core_type = #tpu.core_type<tc>, window_params = [{transform_indices = @transform_0, window_bounds = array<i64: 1, 8, 128>}, {pipeline_mode = #tpu.pipeline_mode<synchronous>, transform_indices = @transform_1, window_bounds = array<i64: 1, 128>}, {transform_indices = @transform_2, window_bounds = array<i64: 1, 8, 128>}]} {
    %c0 = arith.constant 0 : index
    %c0_0 = arith.constant 0 : index
    %c0_1 = arith.constant 0 : index
    %0 = vector.load %arg3[%c0, %c0_0, %c0_1] : memref<1x8x128xf32, #tpu.memory_space<vmem>>, vector<1x8x128xf32>
    %1 = vector.shape_cast %0 : vector<1x8x128xf32> to vector<8x128xf32>
    %2 = tpu.iota {dimensions = array<i32: 0>} : vector<8x8xi32>
    %3 = tpu.iota {dimensions = array<i32: 1>} : vector<8x8xi32>
    %4 = arith.cmpi sge, %2, %3 : vector<8x8xi32>
    %5 = arith.subi %2, %3 : vector<8x8xi32>
    %c0_i32 = arith.constant 0 : i32
    %6 = vector.broadcast %c0_i32 : i32 to vector<8x8xi32>
    %7 = arith.maxsi %5, %6 : vector<8x8xi32>
    %8 = arith.sitofp %7 : vector<8x8xi32> to vector<8x8xf32>
    %9 = tpu.iota {dimensions = array<i32: 0>} : vector<8x1xi32>
    %10 = arith.sitofp %9 : vector<8x1xi32> to vector<8x1xf32>
    %c0_2 = arith.constant 0 : index
    %11 = memref.load %arg1[%c0_2] : memref<4xf32, #tpu.memory_space<smem>>
    %c0_3 = arith.constant 0 : index
    %12 = memref.load %arg2[%c0_3] : memref<4xf32, #tpu.memory_space<smem>>
    %13 = vector.broadcast %12 : f32 to vector<8x8xf32>
    %14 = arith.mulf %8, %13 : vector<8x8xf32>
    %15 = math.exp %14 : vector<8x8xf32>
    %16 = vector.broadcast %11 : f32 to vector<8x8xf32>
    %17 = arith.mulf %16, %15 : vector<8x8xf32>
    %cst = arith.constant 0.000000e+00 : f32
    %18 = vector.broadcast %cst : f32 to vector<8x8xf32>
    %19 = arith.select %4, %17, %18 : vector<8x8xi1>, vector<8x8xf32>
    %cst_4 = arith.constant 1.000000e+00 : f32
    %20 = vector.broadcast %cst_4 : f32 to vector<8x1xf32>
    %21 = arith.addf %10, %20 : vector<8x1xf32>
    %22 = vector.broadcast %12 : f32 to vector<8x1xf32>
    %23 = arith.mulf %21, %22 : vector<8x1xf32>
    %24 = math.exp %23 : vector<8x1xf32>
    %25 = vector.extract_strided_slice %1 {offsets = [0, 0], sizes = [8, 32], strides = [1, 1]} : vector<8x128xf32> to vector<8x32xf32>
    %c0_5 = arith.constant 0 : index
    %c0_6 = arith.constant 0 : index
    %26 = vector.load %arg4[%c0_5, %c0_6] : memref<1x128xf32, #tpu.memory_space<vmem>>, vector<1x32xf32>
    %27 = vector.shape_cast %26 : vector<1x32xf32> to vector<32xf32>
    %cst_7 = arith.constant dense<0.000000e+00> : vector<8x32xf32>
    %28 = tpu.matmul %19, %25, %cst_7 {dimension_numbers = #tpu.dot_dimension_numbers<[1], [0], [0], [1], [0, 0, 1, 1], [], []>} : vector<8x8xf32>, vector<8x32xf32>, vector<8x32xf32> -> vector<8x32xf32>
    %29 = vector.shape_cast %27 : vector<32xf32> to vector<1x32xf32>
    %30 = vector.broadcast %24 : vector<8x1xf32> to vector<8x32xf32>
    %31 = vector.broadcast %29 : vector<1x32xf32> to vector<8x32xf32>
    %32 = arith.mulf %30, %31 : vector<8x32xf32>
    %33 = arith.addf %28, %32 : vector<8x32xf32>
    %c1 = arith.constant 1 : index
    %34 = memref.load %arg1[%c1] : memref<4xf32, #tpu.memory_space<smem>>
    %c1_8 = arith.constant 1 : index
    %35 = memref.load %arg2[%c1_8] : memref<4xf32, #tpu.memory_space<smem>>
    %36 = vector.broadcast %35 : f32 to vector<8x8xf32>
    %37 = arith.mulf %8, %36 : vector<8x8xf32>
    %38 = math.exp %37 : vector<8x8xf32>
    %39 = vector.broadcast %34 : f32 to vector<8x8xf32>
    %40 = arith.mulf %39, %38 : vector<8x8xf32>
    %cst_9 = arith.constant 0.000000e+00 : f32
    %41 = vector.broadcast %cst_9 : f32 to vector<8x8xf32>
    %42 = arith.select %4, %40, %41 : vector<8x8xi1>, vector<8x8xf32>
    %cst_10 = arith.constant 1.000000e+00 : f32
    %43 = vector.broadcast %cst_10 : f32 to vector<8x1xf32>
    %44 = arith.addf %10, %43 : vector<8x1xf32>
    %45 = vector.broadcast %35 : f32 to vector<8x1xf32>
    %46 = arith.mulf %44, %45 : vector<8x1xf32>
    %47 = math.exp %46 : vector<8x1xf32>
    %48 = vector.extract_strided_slice %1 {offsets = [0, 32], sizes = [8, 32], strides = [1, 1]} : vector<8x128xf32> to vector<8x32xf32>
    %c0_11 = arith.constant 0 : index
    %c32 = arith.constant 32 : index
    %49 = vector.load %arg4[%c0_11, %c32] : memref<1x128xf32, #tpu.memory_space<vmem>>, vector<1x32xf32>
    %50 = vector.shape_cast %49 : vector<1x32xf32> to vector<32xf32>
    %cst_12 = arith.constant dense<0.000000e+00> : vector<8x32xf32>
    %51 = tpu.matmul %42, %48, %cst_12 {dimension_numbers = #tpu.dot_dimension_numbers<[1], [0], [0], [1], [0, 0, 1, 1], [], []>} : vector<8x8xf32>, vector<8x32xf32>, vector<8x32xf32> -> vector<8x32xf32>
    %52 = vector.shape_cast %50 : vector<32xf32> to vector<1x32xf32>
    %53 = vector.broadcast %47 : vector<8x1xf32> to vector<8x32xf32>
    %54 = vector.broadcast %52 : vector<1x32xf32> to vector<8x32xf32>
    %55 = arith.mulf %53, %54 : vector<8x32xf32>
    %56 = arith.addf %51, %55 : vector<8x32xf32>
    %c2 = arith.constant 2 : index
    %57 = memref.load %arg1[%c2] : memref<4xf32, #tpu.memory_space<smem>>
    %c2_13 = arith.constant 2 : index
    %58 = memref.load %arg2[%c2_13] : memref<4xf32, #tpu.memory_space<smem>>
    %59 = vector.broadcast %58 : f32 to vector<8x8xf32>
    %60 = arith.mulf %8, %59 : vector<8x8xf32>
    %61 = math.exp %60 : vector<8x8xf32>
    %62 = vector.broadcast %57 : f32 to vector<8x8xf32>
    %63 = arith.mulf %62, %61 : vector<8x8xf32>
    %cst_14 = arith.constant 0.000000e+00 : f32
    %64 = vector.broadcast %cst_14 : f32 to vector<8x8xf32>
    %65 = arith.select %4, %63, %64 : vector<8x8xi1>, vector<8x8xf32>
    %cst_15 = arith.constant 1.000000e+00 : f32
    %66 = vector.broadcast %cst_15 : f32 to vector<8x1xf32>
    %67 = arith.addf %10, %66 : vector<8x1xf32>
    %68 = vector.broadcast %58 : f32 to vector<8x1xf32>
    %69 = arith.mulf %67, %68 : vector<8x1xf32>
    %70 = math.exp %69 : vector<8x1xf32>
    %71 = vector.extract_strided_slice %1 {offsets = [0, 64], sizes = [8, 32], strides = [1, 1]} : vector<8x128xf32> to vector<8x32xf32>
    %c0_16 = arith.constant 0 : index
    %c64 = arith.constant 64 : index
    %72 = vector.load %arg4[%c0_16, %c64] : memref<1x128xf32, #tpu.memory_space<vmem>>, vector<1x32xf32>
    %73 = vector.shape_cast %72 : vector<1x32xf32> to vector<32xf32>
    %cst_17 = arith.constant dense<0.000000e+00> : vector<8x32xf32>
    %74 = tpu.matmul %65, %71, %cst_17 {dimension_numbers = #tpu.dot_dimension_numbers<[1], [0], [0], [1], [0, 0, 1, 1], [], []>} : vector<8x8xf32>, vector<8x32xf32>, vector<8x32xf32> -> vector<8x32xf32>
    %75 = vector.shape_cast %73 : vector<32xf32> to vector<1x32xf32>
    %76 = vector.broadcast %70 : vector<8x1xf32> to vector<8x32xf32>
    %77 = vector.broadcast %75 : vector<1x32xf32> to vector<8x32xf32>
    %78 = arith.mulf %76, %77 : vector<8x32xf32>
    %79 = arith.addf %74, %78 : vector<8x32xf32>
    %c3 = arith.constant 3 : index
    %80 = memref.load %arg1[%c3] : memref<4xf32, #tpu.memory_space<smem>>
    %c3_18 = arith.constant 3 : index
    %81 = memref.load %arg2[%c3_18] : memref<4xf32, #tpu.memory_space<smem>>
    %82 = vector.broadcast %81 : f32 to vector<8x8xf32>
    %83 = arith.mulf %8, %82 : vector<8x8xf32>
    %84 = math.exp %83 : vector<8x8xf32>
    %85 = vector.broadcast %80 : f32 to vector<8x8xf32>
    %86 = arith.mulf %85, %84 : vector<8x8xf32>
    %cst_19 = arith.constant 0.000000e+00 : f32
    %87 = vector.broadcast %cst_19 : f32 to vector<8x8xf32>
    %88 = arith.select %4, %86, %87 : vector<8x8xi1>, vector<8x8xf32>
    %cst_20 = arith.constant 1.000000e+00 : f32
    %89 = vector.broadcast %cst_20 : f32 to vector<8x1xf32>
    %90 = arith.addf %10, %89 : vector<8x1xf32>
    %91 = vector.broadcast %81 : f32 to vector<8x1xf32>
    %92 = arith.mulf %90, %91 : vector<8x1xf32>
    %93 = math.exp %92 : vector<8x1xf32>
    %94 = vector.extract_strided_slice %1 {offsets = [0, 96], sizes = [8, 32], strides = [1, 1]} : vector<8x128xf32> to vector<8x32xf32>
    %c0_21 = arith.constant 0 : index
    %c96 = arith.constant 96 : index
    %95 = vector.load %arg4[%c0_21, %c96] : memref<1x128xf32, #tpu.memory_space<vmem>>, vector<1x32xf32>
    %96 = vector.shape_cast %95 : vector<1x32xf32> to vector<32xf32>
    %cst_22 = arith.constant dense<0.000000e+00> : vector<8x32xf32>
    %97 = tpu.matmul %88, %94, %cst_22 {dimension_numbers = #tpu.dot_dimension_numbers<[1], [0], [0], [1], [0, 0, 1, 1], [], []>} : vector<8x8xf32>, vector<8x32xf32>, vector<8x32xf32> -> vector<8x32xf32>
    %98 = vector.shape_cast %96 : vector<32xf32> to vector<1x32xf32>
    %99 = vector.broadcast %93 : vector<8x1xf32> to vector<8x32xf32>
    %100 = vector.broadcast %98 : vector<1x32xf32> to vector<8x32xf32>
    %101 = arith.mulf %99, %100 : vector<8x32xf32>
    %102 = arith.addf %97, %101 : vector<8x32xf32>
    %103 = tpu.concatenate %33, %56, %79, %102 in 1 : vector<8x32xf32>, vector<8x32xf32>, vector<8x32xf32>, vector<8x32xf32> -> vector<8x128xf32>
    %c0_23 = arith.constant 0 : index
    %c0_24 = arith.constant 0 : index
    %c0_25 = arith.constant 0 : index
    %104 = vector.load %arg5[%c0_23, %c0_24, %c0_25] : memref<1x8x128xf32, #tpu.memory_space<vmem>>, vector<1x8x128xf32>
    %105 = vector.shape_cast %104 : vector<1x8x128xf32> to vector<8x128xf32>
    %106 = vector.shape_cast %103 : vector<8x128xf32> to vector<1x8x128xf32>
    tpu.vector_store %arg5[%c0_23, %c0_24, %c0_25], %106 {strides = array<i32>} : memref<1x8x128xf32, #tpu.memory_space<vmem>>, vector<1x8x128xf32>,
    return
  }
  func.func @transform_0(%arg0: i32, %arg1: memref<4xf32, #tpu.memory_space<smem>>, %arg2: memref<4xf32, #tpu.memory_space<smem>>) -> (i32, i32, i32) {
    %c0_i32 = arith.constant 0 : i32
    %c0_i32_0 = arith.constant 0 : i32
    %c0_i32_1 = arith.constant 0 : i32
    return %arg0, %c0_i32, %c0_i32_0 : i32, i32, i32
  }
  func.func @transform_1(%arg0: i32, %arg1: memref<4xf32, #tpu.memory_space<smem>>, %arg2: memref<4xf32, #tpu.memory_space<smem>>) -> (i32, i32) {
    %c0_i32 = arith.constant 0 : i32
    %c0_i32_0 = arith.constant 0 : i32
    %c0_i32_1 = arith.constant 0 : i32
    return %c0_i32, %c0_i32_0 : i32, i32
  }
  func.func @transform_2(%arg0: i32, %arg1: memref<4xf32, #tpu.memory_space<smem>>, %arg2: memref<4xf32, #tpu.memory_space<smem>>) -> (i32, i32, i32) {
    %c0_i32 = arith.constant 0 : i32
    %c0_i32_0 = arith.constant 0 : i32
    %c0_i32_1 = arith.constant 0 : i32
    return %arg0, %c0_i32, %c0_i32_0 : i32, i32, i32
  }
}

</mosaic_0001>

<llo_original>
// kernel: tpu_custom_call.1
$region0: #{tpu_custom_call.1}
  #allocation0 [shape = 'u32[]', space=smem, size = 0x4, offset = 0x4, fixed_abs, tag = 'smem constant byte address 0x4 - core index']
  #allocation1 [shape = 'u32[144,128]{1,0:T(1,128)}', space=vmem, size = 0x12000, scoped, tag = 'internal scratch']
  #allocation2 [shape = 's32[1]{0}', space=sflag, size = 0x4, scoped, tag = 'scoped memory for tpu_custom_call.1']
  #allocation3 [shape = 'u8[512]{0}', space=smem, size = 0x200, scoped, tag = 'prefetched SMEM operand 0']
  #allocation4 [shape = 'u8[512]{0}', space=smem, size = 0x200, scoped, tag = 'prefetched SMEM operand 1']
  %s0 = inlined_call_operand.hbm [shape: f32[4], index: 0, kind: input, shape index: {}]
  %s1 = inlined_call_operand.vmem [shape: f32[4], index: 1, kind: input, shape index: {}]
  %s2 = inlined_call_operand.hbm [shape: f32[2,8,128], index: 2, kind: input, shape index: {}]
  %s3 = inlined_call_operand.vmem [shape: f32[1,128], index: 3, kind: input, shape index: {}]
  %s4 = inlined_call_operand.hbm [shape: f32[2,8,128], index: 4, kind: output, shape index: {}]
  %s5 = sld [smem:[#allocation0]]
  $region45: #{tpu_custom_call.1} parent=0
    _
  %s7 = ssub.s32 1, %s5
  %s8 = scalar_select 0, %s7, %s5
  %10 = dma.hbm_to_smem %s0, 16, [#allocation3], [#allocation2]
  %s11 = sshll.u32 %s1, 4
  %s12 = int_to_ptr.vmem [resolvable:$true] %s11
  %14 = dma.vmem_to_smem %s12, 16, [#allocation4], [#allocation2]
  %15 = dma.done [#allocation2], 32
  %16 = sfence
  $region1: #{tpu_custom_call.1} parent=0
    #allocation5 [shape = 'u8[8192]{0}', space=vmem, size = 0x2000, scoped, tag = 'input window, operand 2']
    #allocation6 [shape = 's32[2]{0}', space=sflag, size = 0x8, scoped, tag = 'scoped memory for tpu_custom_call.1']
    #allocation7 [shape = 's32[2]{0}', space=sflag, size = 0x8, scoped, tag = 'scoped memory for tpu_custom_call.1']
    #allocation8 [shape = 'u8[8192]{0}', space=vmem, size = 0x2000, scoped, tag = 'output window, operand 0']
    %17 = vsyncpa [#allocation6], 0
    %s18 = scalar_lea.sflag [#allocation6], 1
    %19 = vsyncpa %s18, 0
    %20 = vsyncpa [#allocation7], 0
    %s21 = scalar_lea.sflag [#allocation7], 1
    %22 = vsyncpa %s21, 0
    loop: start=0, step=1, limit=4
    $region2: #{tpu_custom_call.1} parent=1 // loop_pre_header
      _
    $region3: #{tpu_custom_call.1} parent=1 // loop_header
      %s24 = sphi 0, %s28
      %p25 = scmp.ge.s32.totalorder %s24, 4
      %s34 = sphi 0, %s36
      %s37 = sphi 0, %s34
      %s38 = sphi 0, %s37
      %s54 = sphi 0, %s38
      %s58 = sphi 0, %s58
      %s60 = sphi 0, %s58
      %s61 = sphi 0, %s60
      %s75 = sphi 0, %s61
      %s81 = sphi 0, %s83
      %s84 = sphi 0, %s81
      %s85 = sphi 0, %s84
      %s101 = sphi 0, %s85
    $region4: #{tpu_custom_call.1} parent=1 // loop_header_branch
      %27 = sbr.rel (%p25) target = $region8
    $region5: #{tpu_custom_call.1} parent=1 // loop_body
      %s29 = ssub.s32 %s24, 1
      %s30 = ssub.s32 %s24, 2
      %s31 = sadd.s32 %s24, 1
      %s32 = ssub.s32 %s24, %s31
      %p33 = scmp.eq.s32.totalorder %s32, 0
      %s35 = sadd.s32 %s34, 1
      %s36 = scalar_select %p33, %s34, %s35
      %p39 = pneg %p33
      %p40 = scmp.eq.s32.totalorder %s24, 1
      %p41 = por %p39, %p40
      %p42 = scmp.ne.s32.totalorder %s34, %s37
      %p43 = scmp.eq.s32.totalorder %s24, 0
      %p44 = por %p42, %p43
      %p45 = scmp.ne.s32.totalorder %s34, %s37
      %p46 = scmp.eq.s32.totalorder %s29, 1
      %p47 = por %p45, %p46
      %p48 = scmp.ne.s32.totalorder %s37, %s38
      %p49 = scmp.eq.s32.totalorder %s29, 0
      %p50 = por %p48, %p49
      %p51 = scmp.ne.s32.totalorder %s37, %s38
      %p52 = scmp.eq.s32.totalorder %s30, 1
      %p53 = por %p51, %p52
      %p55 = scmp.ne.s32.totalorder %s38, %s54
      %p56 = scmp.eq.s32.totalorder %s30, 0
      %p57 = por %p55, %p56
      %s59 = sadd.s32 %s58, 1
      %p62 = scmp.eq.s32.totalorder %s24, 1
      %p63 = scmp.ne.s32.totalorder %s58, %s60
      %p64 = scmp.eq.s32.totalorder %s24, 0
      %p65 = por %p63, %p64
      %p66 = scmp.ne.s32.totalorder %s58, %s60
      %p67 = scmp.eq.s32.totalorder %s29, 1
      %p68 = por %p66, %p67
      %p69 = scmp.ne.s32.totalorder %s60, %s61
      %p70 = scmp.eq.s32.totalorder %s29, 0
      %p71 = por %p69, %p70
      %p72 = scmp.ne.s32.totalorder %s60, %s61
      %p73 = scmp.eq.s32.totalorder %s30, 1
      %p74 = por %p72, %p73
      %p76 = scmp.ne.s32.totalorder %s61, %s75
      %p77 = scmp.eq.s32.totalorder %s30, 0
      %p78 = por %p76, %p77
      %s79 = ssub.s32 %s24, %s31
      %p80 = scmp.eq.s32.totalorder %s79, 0
      %s82 = sadd.s32 %s81, 1
      %s83 = scalar_select %p80, %s81, %s82
      %p86 = pneg %p80
      %p87 = scmp.eq.s32.totalorder %s24, 1
      %p88 = por %p86, %p87
      %p89 = scmp.ne.s32.totalorder %s81, %s84
      %p90 = scmp.eq.s32.totalorder %s24, 0
      %p91 = por %p89, %p90
      %p92 = scmp.ne.s32.totalorder %s81, %s84
      %p93 = scmp.eq.s32.totalorder %s29, 1
      %p94 = por %p92, %p93
      %p95 = scmp.ne.s32.totalorder %s84, %s85
      %p96 = scmp.eq.s32.totalorder %s29, 0
      %p97 = por %p95, %p96
      %p98 = scmp.ne.s32.totalorder %s84, %s85
      %p99 = scmp.eq.s32.totalorder %s30, 1
      %p100 = por %p98, %p99
      %p102 = scmp.ne.s32.totalorder %s85, %s101
      %p103 = scmp.eq.s32.totalorder %s30, 0
      %p104 = por %p102, %p103
      %p105 = scmp.le.s32.totalorder 1, %s24
      %p106 = scmp.lt.s32.totalorder %s24, 3
      %p107 = pnand %p105, %p106
      %p108 = pneg %p107
      // Predicated region
      $region9: #{tpu_custom_call.1} parent=5 // pred_check
        _
      $region10: #{tpu_custom_call.1} parent=5 // pred_check_branch
        %110 = sbr.rel (%p107) target = $region12
      $region11: #{tpu_custom_call.1} parent=5 // pred_region
        %s111 = ssub.s32 %s24, 1
        // Predicated region
        $region13: #{tpu_custom_call.1} parent=11 // pred_check
          %p112 = pneg %p71
        $region14: #{tpu_custom_call.1} parent=11 // pred_check_branch
          %114 = sbr.rel (%p112) target = $region16
        $region15: #{tpu_custom_call.1} parent=11 // pred_region
          _
        $region16: #{tpu_custom_call.1} parent=11 // pred_fallthru
          _
      $region12: #{tpu_custom_call.1} parent=5 // pred_fallthru
        _
      %p115 = scmp.lt.s32.totalorder %s24, 2
      // Predicated region
      $region17: #{tpu_custom_call.1} parent=5 // pred_check
        %p116 = pneg %p115
      $region18: #{tpu_custom_call.1} parent=5 // pred_check_branch
        %118 = sbr.rel (%p116) target = $region20
      $region19: #{tpu_custom_call.1} parent=5 // pred_region
        // Predicated region
        $region21: #{tpu_custom_call.1} parent=19 // pred_check
          %p119 = pneg %p44
        $region22: #{tpu_custom_call.1} parent=19 // pred_check_branch
          %121 = sbr.rel (%p119) target = $region24
        $region23: #{tpu_custom_call.1} parent=19 // pred_region
          %s122 = sand.u32 %s34, 1
          %s123 = scalar_lea.sflag [#allocation6], %s122
          %s124 = sand.u32 %s34, 1
          %s125 = smul.addr %s124, 8
          %s126 = scalar_lea.vmem [#allocation5], %s125
          %s128 = ssub.s32 128, 128
          %129 = vsyncadd %s123, %s128
          %s130 = smul.addr %s24, 128
          %s131 = scalar_lea.hbm %s2, %s130
          %s133 = sshll.u32 %s126, 4
          %s134 = int_to_ptr.vmem [resolvable:$true] %s133
          %136 = dma.hbm_to_vmem [thread:$0]  %s131, 128, %s134, %s123
        $region24: #{tpu_custom_call.1} parent=19 // pred_fallthru
          _
      $region20: #{tpu_custom_call.1} parent=5 // pred_fallthru
        _
      %p137 = scmp.le.s32.totalorder 1, %s24
      %p138 = scmp.lt.s32.totalorder %s24, 3
      %p139 = pnand %p137, %p138
      %p140 = pneg %p139
      // Predicated region
      $region25: #{tpu_custom_call.1} parent=5 // pred_check
        _
      $region26: #{tpu_custom_call.1} parent=5 // pred_check_branch
        %142 = sbr.rel (%p139) target = $region28
      $region27: #{tpu_custom_call.1} parent=5 // pred_region
        %s143 = ssub.s32 %s24, 1
        %s144 = sand.u32 %s37, 1
        %s145 = scalar_lea.sflag [#allocation6], %s144
        %s146 = sand.u32 %s37, 1
        %s147 = smul.addr %s146, 8
        %s148 = scalar_lea.vmem [#allocation5], %s147
        // Predicated region
        $region29: #{tpu_custom_call.1} parent=27 // pred_check
          %p149 = pneg %p50
        $region30: #{tpu_custom_call.1} parent=27 // pred_check_branch
          %151 = sbr.rel (%p149) target = $region32
        $region31: #{tpu_custom_call.1} parent=27 // pred_region
          %152 = dma.done %s145, 128
        $region32: #{tpu_custom_call.1} parent=27 // pred_fallthru
          _
        %s153 = sand.u32 %s37, 1
        %s154 = scalar_lea.sflag [#allocation6], %s153
        %s155 = sand.u32 %s37, 1
        %s156 = smul.addr %s155, 8
        %s157 = scalar_lea.vmem [#allocation5], %s156
        %p158 = pneg %p50
        %p159 = pneg %p47
        %p160 = pneg %p71
        %p161 = pneg %p68
        %p162 = pneg %p97
        %p163 = pneg %p94
        %s164 = sand.u32 %s84, 1
        %s165 = scalar_lea.sflag [#allocation7], %s164
        %s166 = sand.u32 %s84, 1
        %s167 = smul.addr %s166, 8
        %s168 = scalar_lea.vmem [#allocation8], %s167
        %v169 = vld [vmem:[%s148] sm:$0xff]
        %v170 = vlaneseq
        %v171 = vshrl.u32 %v170, 7
        %v172 = vlaneseq
        %v173 = vand.u32 %v172, 127
        %vm174 = vcmp.ge.s32.totalorder %v171, %v173
        %v175 = vsub.s32 %v171, %v173
        %vm176 = vcmp.gt.s32.totalorder %v175, 0
        %v177 = vsel %vm176, %v175, 0
        %v178 = vcvt.s32.f32 %v177
        %v179 = vcvt.s32.f32 %v171
        %s180 = sld [smem:[#allocation3]]
        %s181 = sld [smem:[#allocation4]]
        %v182 = vstv %s181
        %v183 = vmul.f32 %v178, %v182
        %v184 = vmul.f32 %v183, 1.442695
        %v185 = vpow.pop %v184
        %v186 = vstv %s180
        %v187 = vmul.f32 %v186, %v185
        %v188 = vsel %vm174, %v187, 0.0
        %v189 = vadd.f32 %v179, 1.0
        %v190 = vmul.f32 %v189, %v182
        %v191 = vmul.f32 %v190, 1.442695
        %v192 = vpow.pop %v191
        %v193 = vld [vmem:[%s3] sm:$0x1]
        %v195 = vlaneseq
        %v196 = vshrl.u32 %v195, 7
        %v197 = vsub.s32 0, %v196
        %v198 = vrot.slane %v193, %v197
        %v200 = vmul.f32 %v192, %v198
        %vm201 = vcmask 64512
        %v203 = vsel %vm201, %v188, 0
        %205 = vmatprep.subr.mxu0 0.0
        %206 = vmatpush1.msra.mxu0 %v169
        %207 = vmatprep.subr.mxu0 0.0
        %208 = vmatpush1.msra.mxu0 0.0
        %209 = vmatprep.subr.mxu0 0.0
        %210 = vmatpush1.msra.mxu0 0.0
        %211 = vmatprep.subr.mxu0 0.0
        %212 = vmatpush1.msra.mxu0 0.0
        %213 = vmatprep.subr.mxu0 0.0
        %214 = vmatpush1.msra.mxu0 0.0
        %215 = vmatprep.subr.mxu0 0.0
        %216 = vmatpush1.msra.mxu0 0.0
        %217 = vmatprep.subr.mxu0 0.0
        %218 = vmatpush1.msra.mxu0 0.0
        %219 = vmatprep.subr.mxu0 0.0
        %220 = vmatpush1.msra.mxu0 0.0
        %221 = vmatprep.subr.mxu0 0.0
        %222 = vmatpush1.msra.mxu0 0.0
        %223 = vmatprep.subr.mxu0 0.0
        %224 = vmatpush1.msra.mxu0 0.0
        %225 = vmatprep.subr.mxu0 0.0
        %226 = vmatpush1.msra.mxu0 0.0
        %227 = vmatprep.subr.mxu0 0.0
        %228 = vmatpush1.msra.mxu0 0.0
        %229 = vmatprep.subr.mxu0 0.0
        %230 = vmatpush1.msra.mxu0 0.0
        %231 = vmatprep.subr.mxu0 0.0
        %232 = vmatpush1.msra.mxu0 0.0
        %233 = vmatprep.subr.mxu0 0.0
        %234 = vmatpush1.msra.mxu0 0.0
        %235 = vmatprep.subr.mxu0 0.0
        %236 = vmatpush1.msra.mxu0 0.0
        %237 = vmatprep.subr.mxu0 0.0
        %238 = vmatpush1.msra.mxu0 0.0
        %239 = vmatprep.subr.mxu0 0.0
        %240 = vmatpush1.msra.mxu0 0.0
        %241 = vmatprep.subr.mxu0 0.0
        %242 = vmatpush1.msra.mxu0 0.0
        %243 = vmatprep.subr.mxu0 0.0
        %244 = vmatpush1.msra.mxu0 0.0
        %245 = vmatprep.subr.mxu0 0.0
        %246 = vmatpush1.msra.mxu0 0.0
        %247 = vmatprep.subr.mxu0 0.0
        %248 = vmatpush1.msra.mxu0 0.0
        %249 = vmatprep.subr.mxu0 0.0
        %250 = vmatpush1.msra.mxu0 0.0
        %251 = vmatprep.subr.mxu0 0.0
        %252 = vmatpush1.msra.mxu0 0.0
        %253 = vmatprep.subr.mxu0 0.0
        %254 = vmatpush1.msra.mxu0 0.0
        %255 = vmatprep.subr.mxu0 0.0
        %256 = vmatpush1.msra.mxu0 0.0
        %257 = vmatprep.subr.mxu0 0.0
        %258 = vmatpush1.msra.mxu0 0.0
        %259 = vmatprep.subr.mxu0 0.0
        %260 = vmatpush1.msra.mxu0 0.0
        %261 = vmatprep.subr.mxu0 0.0
        %262 = vmatpush1.msra.mxu0 0.0
        %263 = vmatprep.subr.mxu0 0.0
        %264 = vmatpush1.msra.mxu0 0.0
        %265 = vmatprep.subr.mxu0 0.0
        %266 = vmatpush1.msra.mxu0 0.0
        %267 = vmatprep.subr.mxu0 0.0
        %268 = vmatpush1.msra.mxu0 0.0
        %269 = vmatprep.mubr.f32.mxu0 0.0
        %270 = vmatmul.mubr.f32.gmra.mrb[0].mxu0 %v203
        %v271 = vpop.f32.mrb[0].mxu0
        %v272 = vadd.f32 %v200, %v271
        %v273 = vpop.f32.mrb[0].mxu0
        %274 = vdwg.mxu0
        %s275 = sld [smem:[#allocation3 + $0x1]]
        %s276 = sld [smem:[#allocation4 + $0x1]]
        %v277 = vstv %s276
        %v278 = vmul.f32 %v178, %v277
        %v279 = vmul.f32 %v278, 1.442695
        %v280 = vpow.pop %v279
        %v281 = vstv %s275
        %v282 = vmul.f32 %v281, %v280
        %v283 = vsel %vm174, %v282, 0.0
        %v284 = vmul.f32 %v189, %v277
        %v285 = vmul.f32 %v284, 1.442695
        %v286 = vpow.pop %v285
        %v287 = vmul.f32 %v286, %v198
        %289 = vrot.lane.b32.xlu0 %v169, 96
        %v290 = vpop.permute.xlu0 %289
        %293 = vrot.lane.b32.xlu0 %v287, 96
        %v294 = vpop.permute.xlu0 %293
        %v297 = vsel %vm201, %v283, 0
        %299 = vmatprep.subr.mxu0 0.0
        %300 = vmatpush1.msra.mxu0 %v290
        %301 = vmatprep.subr.mxu0 0.0
        %302 = vmatpush1.msra.mxu0 0.0
        %303 = vmatprep.subr.mxu0 0.0
        %304 = vmatpush1.msra.mxu0 0.0
        %305 = vmatprep.subr.mxu0 0.0
        %306 = vmatpush1.msra.mxu0 0.0
        %307 = vmatprep.subr.mxu0 0.0
        %308 = vmatpush1.msra.mxu0 0.0
        %309 = vmatprep.subr.mxu0 0.0
        %310 = vmatpush1.msra.mxu0 0.0
        %311 = vmatprep.subr.mxu0 0.0
        %312 = vmatpush1.msra.mxu0 0.0
        %313 = vmatprep.subr.mxu0 0.0
        %314 = vmatpush1.msra.mxu0 0.0
        %315 = vmatprep.subr.mxu0 0.0
        %316 = vmatpush1.msra.mxu0 0.0
        %317 = vmatprep.subr.mxu0 0.0
        %318 = vmatpush1.msra.mxu0 0.0
        %319 = vmatprep.subr.mxu0 0.0
        %320 = vmatpush1.msra.mxu0 0.0
        %321 = vmatprep.subr.mxu0 0.0
        %322 = vmatpush1.msra.mxu0 0.0
        %323 = vmatprep.subr.mxu0 0.0
        %324 = vmatpush1.msra.mxu0 0.0
        %325 = vmatprep.subr.mxu0 0.0
        %326 = vmatpush1.msra.mxu0 0.0
        %327 = vmatprep.subr.mxu0 0.0
        %328 = vmatpush1.msra.mxu0 0.0
        %329 = vmatprep.subr.mxu0 0.0
        %330 = vmatpush1.msra.mxu0 0.0
        %331 = vmatprep.subr.mxu0 0.0
        %332 = vmatpush1.msra.mxu0 0.0
        %333 = vmatprep.subr.mxu0 0.0
        %334 = vmatpush1.msra.mxu0 0.0
        %335 = vmatprep.subr.mxu0 0.0
        %336 = vmatpush1.msra.mxu0 0.0
        %337 = vmatprep.subr.mxu0 0.0
        %338 = vmatpush1.msra.mxu0 0.0
        %339 = vmatprep.subr.mxu0 0.0
        %340 = vmatpush1.msra.mxu0 0.0
        %341 = vmatprep.subr.mxu0 0.0
        %342 = vmatpush1.msra.mxu0 0.0
        %343 = vmatprep.subr.mxu0 0.0
        %344 = vmatpush1.msra.mxu0 0.0
        %345 = vmatprep.subr.mxu0 0.0
        %346 = vmatpush1.msra.mxu0 0.0
        %347 = vmatprep.subr.mxu0 0.0
        %348 = vmatpush1.msra.mxu0 0.0
        %349 = vmatprep.subr.mxu0 0.0
        %350 = vmatpush1.msra.mxu0 0.0
        %351 = vmatprep.subr.mxu0 0.0
        %352 = vmatpush1.msra.mxu0 0.0
        %353 = vmatprep.subr.mxu0 0.0
        %354 = vmatpush1.msra.mxu0 0.0
        %355 = vmatprep.subr.mxu0 0.0
        %356 = vmatpush1.msra.mxu0 0.0
        %357 = vmatprep.subr.mxu0 0.0
        %358 = vmatpush1.msra.mxu0 0.0
        %359 = vmatprep.subr.mxu0 0.0
        %360 = vmatpush1.msra.mxu0 0.0
        %361 = vmatprep.subr.mxu0 0.0
        %362 = vmatpush1.msra.mxu0 0.0
        %363 = vmatprep.mubr.f32.mxu0 0.0
        %364 = vmatmul.mubr.f32.gmra.mrb[0].mxu0 %v297
        %v365 = vpop.f32.mrb[0].mxu0
        %v366 = vadd.f32 %v294, %v365
        %v367 = vpop.f32.mrb[0].mxu0
        %368 = vdwg.mxu0
        %s369 = sld [smem:[#allocation3 + $0x2]]
        %s370 = sld [smem:[#allocation4 + $0x2]]
        %v371 = vstv %s370
        %v372 = vmul.f32 %v178, %v371
        %v373 = vmul.f32 %v372, 1.442695
        %v374 = vpow.pop %v373
        %v375 = vstv %s369
        %v376 = vmul.f32 %v375, %v374
        %v377 = vsel %vm174, %v376, 0.0
        %v378 = vmul.f32 %v189, %v371
        %v379 = vmul.f32 %v378, 1.442695
        %v380 = vpow.pop %v379
        %v381 = vmul.f32 %v380, %v198
        %382 = vrot.lane.b32.xlu0 %v169, 64
        %v383 = vpop.permute.xlu0 %382
        %386 = vrot.lane.b32.xlu0 %v381, 64
        %v387 = vpop.permute.xlu0 %386
        %v390 = vsel %vm201, %v377, 0
        %392 = vmatprep.subr.mxu0 0.0
        %393 = vmatpush1.msra.mxu0 %v383
        %394 = vmatprep.subr.mxu0 0.0
        %395 = vmatpush1.msra.mxu0 0.0
        %396 = vmatprep.subr.mxu0 0.0
        %397 = vmatpush1.msra.mxu0 0.0
        %398 = vmatprep.subr.mxu0 0.0
        %399 = vmatpush1.msra.mxu0 0.0
        %400 = vmatprep.subr.mxu0 0.0
        %401 = vmatpush1.msra.mxu0 0.0
        %402 = vmatprep.subr.mxu0 0.0
        %403 = vmatpush1.msra.mxu0 0.0
        %404 = vmatprep.subr.mxu0 0.0
        %405 = vmatpush1.msra.mxu0 0.0
        %406 = vmatprep.subr.mxu0 0.0
        %407 = vmatpush1.msra.mxu0 0.0
        %408 = vmatprep.subr.mxu0 0.0
        %409 = vmatpush1.msra.mxu0 0.0
        %410 = vmatprep.subr.mxu0 0.0
        %411 = vmatpush1.msra.mxu0 0.0
        %412 = vmatprep.subr.mxu0 0.0
        %413 = vmatpush1.msra.mxu0 0.0
        %414 = vmatprep.subr.mxu0 0.0
        %415 = vmatpush1.msra.mxu0 0.0
        %416 = vmatprep.subr.mxu0 0.0
        %417 = vmatpush1.msra.mxu0 0.0
        %418 = vmatprep.subr.mxu0 0.0
        %419 = vmatpush1.msra.mxu0 0.0
        %420 = vmatprep.subr.mxu0 0.0
        %421 = vmatpush1.msra.mxu0 0.0
        %422 = vmatprep.subr.mxu0 0.0
        %423 = vmatpush1.msra.mxu0 0.0
        %424 = vmatprep.subr.mxu0 0.0
        %425 = vmatpush1.msra.mxu0 0.0
        %426 = vmatprep.subr.mxu0 0.0
        %427 = vmatpush1.msra.mxu0 0.0
        %428 = vmatprep.subr.mxu0 0.0
        %429 = vmatpush1.msra.mxu0 0.0
        %430 = vmatprep.subr.mxu0 0.0
        %431 = vmatpush1.msra.mxu0 0.0
        %432 = vmatprep.subr.mxu0 0.0
        %433 = vmatpush1.msra.mxu0 0.0
        %434 = vmatprep.subr.mxu0 0.0
        %435 = vmatpush1.msra.mxu0 0.0
        %436 = vmatprep.subr.mxu0 0.0
        %437 = vmatpush1.msra.mxu0 0.0
        %438 = vmatprep.subr.mxu0 0.0
        %439 = vmatpush1.msra.mxu0 0.0
        %440 = vmatprep.subr.mxu0 0.0
        %441 = vmatpush1.msra.mxu0 0.0
        %442 = vmatprep.subr.mxu0 0.0
        %443 = vmatpush1.msra.mxu0 0.0
        %444 = vmatprep.subr.mxu0 0.0
        %445 = vmatpush1.msra.mxu0 0.0
        %446 = vmatprep.subr.mxu0 0.0
        %447 = vmatpush1.msra.mxu0 0.0
        %448 = vmatprep.subr.mxu0 0.0
        %449 = vmatpush1.msra.mxu0 0.0
        %450 = vmatprep.subr.mxu0 0.0
        %451 = vmatpush1.msra.mxu0 0.0
        %452 = vmatprep.subr.mxu0 0.0
        %453 = vmatpush1.msra.mxu0 0.0
        %454 = vmatprep.subr.mxu0 0.0
        %455 = vmatpush1.msra.mxu0 0.0
        %456 = vmatprep.mubr.f32.mxu0 0.0
        %457 = vmatmul.mubr.f32.gmra.mrb[0].mxu0 %v390
        %v458 = vpop.f32.mrb[0].mxu0
        %v459 = vadd.f32 %v387, %v458
        %v460 = vpop.f32.mrb[0].mxu0
        %461 = vdwg.mxu0
        %s462 = sld [smem:[#allocation3 + $0x3]]
        %s463 = sld [smem:[#allocation4 + $0x3]]
        %v464 = vstv %s463
        %v465 = vmul.f32 %v178, %v464
        %v466 = vmul.f32 %v465, 1.442695
        %v467 = vpow.pop %v466
        %v468 = vstv %s462
        %v469 = vmul.f32 %v468, %v467
        %v470 = vsel %vm174, %v469, 0.0
        %v471 = vmul.f32 %v189, %v464
        %v472 = vmul.f32 %v471, 1.442695
        %v473 = vpow.pop %v472
        %v474 = vmul.f32 %v473, %v198
        %475 = vrot.lane.b32.xlu0 %v169, 32
        %v476 = vpop.permute.xlu0 %475
        %479 = vrot.lane.b32.xlu0 %v474, 32
        %v480 = vpop.permute.xlu0 %479
        %v483 = vsel %vm201, %v470, 0
        %485 = vmatprep.subr.mxu0 0.0
        %486 = vmatpush1.msra.mxu0 %v476
        %487 = vmatprep.subr.mxu0 0.0
        %488 = vmatpush1.msra.mxu0 0.0
        %489 = vmatprep.subr.mxu0 0.0
        %490 = vmatpush1.msra.mxu0 0.0
        %491 = vmatprep.subr.mxu0 0.0
        %492 = vmatpush1.msra.mxu0 0.0
        %493 = vmatprep.subr.mxu0 0.0
        %494 = vmatpush1.msra.mxu0 0.0
        %495 = vmatprep.subr.mxu0 0.0
        %496 = vmatpush1.msra.mxu0 0.0
        %497 = vmatprep.subr.mxu0 0.0
        %498 = vmatpush1.msra.mxu0 0.0
        %499 = vmatprep.subr.mxu0 0.0
        %500 = vmatpush1.msra.mxu0 0.0
        %501 = vmatprep.subr.mxu0 0.0
        %502 = vmatpush1.msra.mxu0 0.0
        %503 = vmatprep.subr.mxu0 0.0
        %504 = vmatpush1.msra.mxu0 0.0
        %505 = vmatprep.subr.mxu0 0.0
        %506 = vmatpush1.msra.mxu0 0.0
        %507 = vmatprep.subr.mxu0 0.0
        %508 = vmatpush1.msra.mxu0 0.0
        %509 = vmatprep.subr.mxu0 0.0
        %510 = vmatpush1.msra.mxu0 0.0
        %511 = vmatprep.subr.mxu0 0.0
        %512 = vmatpush1.msra.mxu0 0.0
        %513 = vmatprep.subr.mxu0 0.0
        %514 = vmatpush1.msra.mxu0 0.0
        %515 = vmatprep.subr.mxu0 0.0
        %516 = vmatpush1.msra.mxu0 0.0
        %517 = vmatprep.subr.mxu0 0.0
        %518 = vmatpush1.msra.mxu0 0.0
        %519 = vmatprep.subr.mxu0 0.0
        %520 = vmatpush1.msra.mxu0 0.0
        %521 = vmatprep.subr.mxu0 0.0
        %522 = vmatpush1.msra.mxu0 0.0
        %523 = vmatprep.subr.mxu0 0.0
        %524 = vmatpush1.msra.mxu0 0.0
        %525 = vmatprep.subr.mxu0 0.0
        %526 = vmatpush1.msra.mxu0 0.0
        %527 = vmatprep.subr.mxu0 0.0
        %528 = vmatpush1.msra.mxu0 0.0
        %529 = vmatprep.subr.mxu0 0.0
        %530 = vmatpush1.msra.mxu0 0.0
        %531 = vmatprep.subr.mxu0 0.0
        %532 = vmatpush1.msra.mxu0 0.0
        %533 = vmatprep.subr.mxu0 0.0
        %534 = vmatpush1.msra.mxu0 0.0
        %535 = vmatprep.subr.mxu0 0.0
        %536 = vmatpush1.msra.mxu0 0.0
        %537 = vmatprep.subr.mxu0 0.0
        %538 = vmatpush1.msra.mxu0 0.0
        %539 = vmatprep.subr.mxu0 0.0
        %540 = vmatpush1.msra.mxu0 0.0
        %541 = vmatprep.subr.mxu0 0.0
        %542 = vmatpush1.msra.mxu0 0.0
        %543 = vmatprep.subr.mxu0 0.0
        %544 = vmatpush1.msra.mxu0 0.0
        %545 = vmatprep.subr.mxu0 0.0
        %546 = vmatpush1.msra.mxu0 0.0
        %547 = vmatprep.subr.mxu0 0.0
        %548 = vmatpush1.msra.mxu0 0.0
        %549 = vmatprep.mubr.f32.mxu0 0.0
        %550 = vmatmul.mubr.f32.gmra.mrb[0].mxu0 %v483
        %v551 = vpop.f32.mrb[0].mxu0
        %v552 = vadd.f32 %v480, %v551
        %v553 = vpop.f32.mrb[0].mxu0
        %554 = vdwg.mxu0
        %556 = vrot.lane.b32.xlu0 %v366, 32
        %v557 = vpop.permute.xlu0 %556
        %560 = vrot.lane.b32.xlu0 %v459, 64
        %v561 = vpop.permute.xlu0 %560
        %564 = vrot.lane.b32.xlu0 %v552, 96
        %v565 = vpop.permute.xlu0 %564
        %vm567 = vcmask 261120
        %v568 = vsel %vm567, %v272, %v557
        %vm569 = vcmask 523264
        %v570 = vsel %vm569, %v568, %v561
        %vm571 = vcmask 785408
        %v572 = vsel %vm571, %v570, %v565
        %573 = vst [vmem:[%s168] sm:$0xff] %v572
        %s574 = sand.u32 %s84, 1
        %s575 = scalar_lea.sflag [#allocation7], %s574
        %s576 = sand.u32 %s84, 1
        %s577 = smul.addr %s576, 8
        %s578 = scalar_lea.vmem [#allocation8], %s577
        // Predicated region
        $region33: #{tpu_custom_call.1} parent=27 // pred_check
          %p579 = pneg %p94
        $region34: #{tpu_custom_call.1} parent=27 // pred_check_branch
          %581 = sbr.rel (%p579) target = $region36
        $region35: #{tpu_custom_call.1} parent=27 // pred_region
          %s583 = ssub.s32 128, 128
          %584 = vsyncadd %s575, %s583
          %s585 = smul.addr %s29, 128
          %s586 = scalar_lea.hbm %s4, %s585
          %s588 = sshll.u32 %s578, 4
          %s589 = int_to_ptr.vmem [resolvable:$true] %s588
          %591 = dma.vmem_to_hbm [thread:$0]  %s589, 128, %s586, %s575
        $region36: #{tpu_custom_call.1} parent=27 // pred_fallthru
          _
      $region28: #{tpu_custom_call.1} parent=5 // pred_fallthru
        _
      %p592 = scmp.le.s32.totalorder 2, %s24
      // Predicated region
      $region37: #{tpu_custom_call.1} parent=5 // pred_check
        %p593 = pneg %p592
      $region38: #{tpu_custom_call.1} parent=5 // pred_check_branch
        %595 = sbr.rel (%p593) target = $region40
      $region39: #{tpu_custom_call.1} parent=5 // pred_region
        %s596 = ssub.s32 %s24, 2
        // Predicated region
        $region41: #{tpu_custom_call.1} parent=39 // pred_check
          %p597 = pneg %p100
        $region42: #{tpu_custom_call.1} parent=39 // pred_check_branch
          %599 = sbr.rel (%p597) target = $region44
        $region43: #{tpu_custom_call.1} parent=39 // pred_region
          %s600 = sand.u32 %s85, 1
          %s601 = scalar_lea.sflag [#allocation7], %s600
          %s602 = sand.u32 %s85, 1
          %s603 = smul.addr %s602, 8
          %s604 = scalar_lea.vmem [#allocation8], %s603
          %605 = dma.done %s601, 128
        $region44: #{tpu_custom_call.1} parent=39 // pred_fallthru
          _
      $region40: #{tpu_custom_call.1} parent=5 // pred_fallthru
        _
    $region6: #{tpu_custom_call.1} parent=1 // loop_footer
      %s28 = sadd.s32 1, %s24
    $region7: #{tpu_custom_call.1} parent=1 // loop_footer_branch
      %23 = sbr.rel target = $region3
    $region8: #{tpu_custom_call.1} parent=1 // loop_exit
      _
    %606 = vsyncpa [#allocation6], 1
    %s607 = scalar_lea.sflag [#allocation6], 1
    %608 = vsyncpa %s607, 1
    %609 = vsyncpa [#allocation7], 1
    %s610 = scalar_lea.sflag [#allocation7], 1
    %611 = vsyncpa %s610, 1

</llo_original>
